<compile_context>
chip_gen: v7x
topology: tpu7x:2x2x1
jax: 0.10.0
libtpu: 0.0.40
codegen_flags: <defaults>
</compile_context>

<pallas_src>
import functools

import jax
import jax.numpy as jnp
from jax import lax
from jax.experimental import pallas as pl
from jax.experimental.pallas import tpu as pltpu

Z_DIM = 1
C_DIM = 2                       # params_dim == mlp.c_dim
HIDDEN = 32
T_STEPS = 16                    # len(t_intg) == output_dim
ZC_DIM = Z_DIM + C_DIM          # loop-invariant MLP input rows [z, ctx0, ctx1]
MLP_IN = 2 + 1 + Z_DIM + C_DIM  # [theta, omega, t, z] ++ context


def _round_up(v, m):
    return ((v + m - 1) // m) * m


def _tpu_defaults():
    """(compute_dtype, two_tensorcores) derived from the local TPU generation."""
    try:
        kind = jax.devices()[0].device_kind.lower()
    except Exception:
        kind = ""
    # bf16 VALU/EUP exist on v6e / v7x; keep the elementwise path f32 on v5e.
    bf16_elementwise = any(tag in kind for tag in ("v6", "v7", "7x"))
    # chips with 2 TensorCores (megacore v4/v5p, v7x): want >= 2 grid steps.
    two_cores = any(tag in kind for tag in ("v7", "7x", "v4", "v5p"))
    return (jnp.bfloat16 if bf16_elementwise else jnp.float32), two_cores


def pendulum_ode_kernel(t_ref, b3_ref, theta0_ref, zc_ref,
                        w1_ref, b1_ref, w2_ref, b2_ref, w3t_ref,
                        y_ref, *, compute_dtype, mxu_dtype, unroll):
    # Layout: feature-major, batch along the 128-lane (last) axis.
    #   theta0_ref : (1, n_tile)
    #   zc_ref     : (ZC_DIM, n_tile)  rows = [z, omega0^2, damping]
    #   y_ref      : (T, n_tile)       theta trajectory, y_ref[k] = theta(t_k)
    cd, md = compute_dtype, mxu_dtype
    n_tile = theta0_ref.shape[-1]
    n_steps = y_ref.shape[0]

    # ---- loop-invariant data (hoisted once per batch tile) -----------------
    zc = zc_ref[...]                                    # (3, n) [z, w0^2, damp]
    omega0_sq = zc[Z_DIM:Z_DIM + 1, :]                  # (1, n) f32 physics
    damping = zc[Z_DIM + 1:Z_DIM + 2, :]                # (1, n) f32 physics

    w1_m = w1_ref[...].astype(md)                       # (32, 6)  MXU operand
    w2_m = w2_ref[...].astype(md)                       # (32, 32) MXU operand
    # broadcasts hoisted out of the loop (JAX does not CSE broadcast_in_dim)
    b1_b = jnp.broadcast_to(b1_ref[...], (HIDDEN, n_tile)).astype(cd)
    b2_b = jnp.broadcast_to(b2_ref[...], (HIDDEN, n_tile)).astype(cd)
    w3_b = jnp.broadcast_to(w3t_ref[...], (HIDDEN, n_tile)).astype(cd)
    b3_s = b3_ref[0]                                    # scalar f32 (SMEM)

    theta0 = theta0_ref[...]                            # (1, n) f32
    state0 = jnp.concatenate(                           # rows = [theta, omega]
        [theta0, jnp.zeros_like(theta0)], axis=0)       # (2, n) f32

    # odeint returns the initial condition at t_intg[0].
    y_ref[0:1, :] = theta0

    def euler_step(k, state):
        t_k = t_ref[k]
        dt = t_ref[k + 1] - t_ref[k]

        # MLPConditionalGenerator([theta, omega, t, z], context=phys_params):
        # whole layer 1 runs on the (otherwise idle) MXU as (32,6) @ (6,n).
        t_row = jnp.full((1, n_tile), t_k, dtype=jnp.float32)
        mlp_in = jnp.concatenate([state, t_row, zc], axis=0).astype(md)
        pre1 = jnp.dot(w1_m, mlp_in,
                       preferred_element_type=jnp.float32).astype(cd) + b1_b
        h1 = jnp.tanh(pre1)                             # EUP (bf16 on v6e/v7x)
        pre2 = jnp.dot(w2_m, h1.astype(md),
                       preferred_element_type=jnp.float32).astype(cd) + b2_b
        h2 = jnp.tanh(pre2)
        # layer 3 (1,32)@(32,n): VPU multiply + sublane reduce, f32 accumulate.
        f_nnet = jnp.sum((w3_b * h2).astype(jnp.float32),
                         axis=0, keepdims=True) + b3_s  # (1, n) f32

        # physics prior (damped pendulum) + [0, f_nnet]; state math stays f32.
        theta = state[0:1, :]
        omega = state[1:2, :]
        domega = -omega0_sq * jnp.sin(theta) - damping * omega + f_nnet
        deriv = jnp.concatenate([omega, domega], axis=0)  # (2, n)
        new_state = state + dt * deriv
        y_ref[pl.ds(k + 1, 1), :] = new_state[0:1, :]
        return new_state

    # Partially unrolled Euler loop: fori_loop bounds live ranges (no full
    # Python unroll -> no spill cascade), the inner static loop still gives the
    # LLO scheduler an `unroll`-step window.
    n_euler = n_steps - 1
    n_outer = n_euler // unroll

    def outer_body(j, state):
        k0 = j * unroll
        for u in range(unroll):
            state = euler_step(k0 + u, state)
        return state

    state = lax.fori_loop(0, n_outer, outer_body, state0)
    for k in range(n_outer * unroll, n_euler):          # static remainder
        state = euler_step(k, state)


def neural_pendulum_forward(x, context, t_intg, params, *, max_tile=256,
                            compute_dtype=None, mxu_dtype=jnp.bfloat16,
                            unroll=3):
    """Pallas equivalent of NeuralPendulum.forward(x, context)."""
    n, m = x.shape
    T = int(t_intg.shape[0])
    # TODO(synk): the original 1-column-context passthrough is not supported;
    #             the MLP's c_dim is hard-coded to C_DIM here.
    assert context.shape[1] >= C_DIM, "context must carry >= C_DIM phys params"
    auto_cd, two_cores = _tpu_defaults()
    if compute_dtype is None:
        compute_dtype = auto_cd

    phys = context[:, :C_DIM]
    w1, b1, w2, b2, w3, b3 = params

    # feature-major layout: batch on the 128-lane axis.
    theta0 = x[:, 0:1].T.astype(jnp.float32)                       # (1, n)
    z = x[:, m - Z_DIM:].T.astype(jnp.float32)                     # (Z_DIM, n)
    zc = jnp.concatenate([z, phys.T.astype(jnp.float32)], axis=0)  # (3, n)

    # lane-aligned batch tiling; 256 lanes keeps the per-step working set
    # comfortably inside the 64 physical vregs (spill avoidance).
    n_128 = _round_up(max(n, 1), 128)
    n_tile = min(max_tile, n_128)
    if two_cores and n_128 > 128 and pl.cdiv(n_128, n_tile) < 2:
        # ensure >= 2 steps on the "parallel" grid axis so both TensorCores
        # of a v7x (or megacore v4/v5p) chip get work.
        n_tile = max(128, _round_up(n_128 // 2, 128))
    n_pad = _round_up(n_128, n_tile)
    if n_pad != n:
        theta0 = jnp.pad(theta0, ((0, 0), (0, n_pad - n)))
        zc = jnp.pad(zc, ((0, 0), (0, n_pad - n)))

    grid = (n_pad // n_tile,)

    def batch_spec(rows):
        return pl.BlockSpec((rows, n_tile), lambda i: (0, i))

    def const_spec(shape):
        return pl.BlockSpec(shape, lambda i: (0, 0))

    smem = pl.BlockSpec(memory_space=pltpu.MemorySpace.SMEM)

    kernel = functools.partial(pendulum_ode_kernel,
                               compute_dtype=compute_dtype,
                               mxu_dtype=mxu_dtype, unroll=unroll)

    y_t = pl.pallas_call(
        kernel,
        out_shape=jax.ShapeDtypeStruct((T, n_pad), jnp.float32),
        grid=grid,
        in_specs=[
            smem,                              # t_intg  (T,)
            smem,                              # b3 scalar (1,)
            batch_spec(1),                     # theta0
            batch_spec(ZC_DIM),                # [z; phys_params]
            const_spec((HIDDEN, MLP_IN)),      # w1
            const_spec((HIDDEN, 1)),           # b1
            const_spec((HIDDEN, HIDDEN)),      # w2
            const_spec((HIDDEN, 1)),           # b2
            const_spec((HIDDEN, 1)),           # w3.T
        ],
        out_specs=batch_spec(T),
        compiler_params=pltpu.CompilerParams(
            dimension_semantics=("parallel",)),
    )(t_intg.astype(jnp.float32),
      jnp.reshape(b3, (1,)).astype(jnp.float32),
      theta0, zc,
      w1.astype(jnp.float32), b1.astype(jnp.float32),
      w2.astype(jnp.float32), b2.astype(jnp.float32),
      w3.T.astype(jnp.float32))

    # TODO(synk): consumers that can take the lane-dense (T, n) layout should
    # use y_t[:, :n] directly; the transpose below is a separate XLA pass kept
    # only to match the module's (n, T) return convention.
    return y_t[:, :n].T                        # (n, T) == yy_seq[:, :, 0].T


def reference_forward(x, context, t_intg, params):
    """Plain-JAX f32 reference (batch-major), same math."""
    w1, b1, w2, b2, w3, b3 = params
    phys = context[:, :C_DIM]
    theta = x[:, 0:1]
    omega = jnp.zeros_like(theta)
    z = x[:, -Z_DIM:]
    ys = [theta]
    for k in range(t_intg.shape[0] - 1):
        tk = t_intg[k]
        dt = t_intg[k + 1] - t_intg[k]
        inp = jnp.concatenate(
            [theta, omega, jnp.full_like(theta, tk), z, phys], axis=1)
        h1 = jnp.tanh(inp @ w1.T + b1.T)
        h2 = jnp.tanh(h1 @ w2.T + b2.T)
        f_nnet = h2 @ w3.T + b3.T
        dtheta = omega
        domega = -phys[:, 0:1] * jnp.sin(theta) - phys[:, 1:2] * omega + f_nnet
        theta = theta + dt * dtheta
        omega = omega + dt * domega
        ys.append(theta)
    return jnp.concatenate(ys, axis=1)


if __name__ == "__main__":
    key = jax.random.PRNGKey(0)
    kx, kc, k1, kb1, k2, kb2, k3, kb3 = jax.random.split(key, 8)

    # small deterministic problem: batch n=8, x = [trajectory features ..., z]
    n = 8
    m = T_STEPS + Z_DIM
    x = jax.random.normal(kx, (n, m), jnp.float32)
    u = jax.random.uniform(kc, (n, C_DIM), jnp.float32)
    # physics params: omega0^2 in [0.5, 2.0), damping in [0, 0.2)
    context = jnp.stack([0.5 + 1.5 * u[:, 0], 0.2 * u[:, 1]], axis=1)
    t_intg = jnp.linspace(0.0, 1.5, T_STEPS, dtype=jnp.float32)

    # deterministic MLP parameters (torch nn.Linear convention: weight (out, in))
    w1 = 0.3 * jax.random.normal(k1, (HIDDEN, MLP_IN), jnp.float32)
    b1 = 0.1 * jax.random.normal(kb1, (HIDDEN, 1), jnp.float32)
    w2 = 0.3 * jax.random.normal(k2, (HIDDEN, HIDDEN), jnp.float32)
    b2 = 0.1 * jax.random.normal(kb2, (HIDDEN, 1), jnp.float32)
    w3 = 0.3 * jax.random.normal(k3, (1, HIDDEN), jnp.float32)
    b3 = 0.1 * jax.random.normal(kb3, (1, 1), jnp.float32)
    params = (w1, b1, w2, b2, w3, b3)

    # tolerance covers bf16 MXU operands (all chips) + bf16 MLP path (v6e/v7x)
    tol = 5e-2

    # check 1: single tile (n=8 padded to 128 lanes)
    y = jax.block_until_ready(
        neural_pendulum_forward(x, context, t_intg, params))
    assert y.shape == (n, T_STEPS), y.shape
    y_ref = reference_forward(x, context, t_intg, params)
    err = float(jnp.max(jnp.abs(y - y_ref)))
    assert err < tol, err

    # check 2: multi-tile grid + lane padding (n=200, tile=128 -> grid=(2,))
    kx2, kc2 = jax.random.fold_in(kx, 1), jax.random.fold_in(kc, 1)
    n2 = 200
    x2 = jax.random.normal(kx2, (n2, m), jnp.float32)
    u2 = jax.random.uniform(kc2, (n2, C_DIM), jnp.float32)
    context2 = jnp.stack([0.5 + 1.5 * u2[:, 0], 0.2 * u2[:, 1]], axis=1)
    y2 = jax.block_until_ready(
        neural_pendulum_forward(x2, context2, t_intg, params, max_tile=128))
    assert y2.shape == (n2, T_STEPS), y2.shape
    y2_ref = reference_forward(x2, context2, t_intg, params)
    err2 = float(jnp.max(jnp.abs(y2 - y2_ref)))
    assert err2 < tol, err2

    print("KERNEL_OK")
</pallas_src>

<mosaic_0001>
module attributes {stable_mosaic.version = 11 : i64} {
  func.func @pendulum_ode_kernel(%arg0: i32, %arg1: memref<16xf32, #tpu.memory_space<smem>>, %arg2: memref<1xf32, #tpu.memory_space<smem>>, %arg3: memref<1x128xf32, #tpu.memory_space<vmem>>, %arg4: memref<3x128xf32, #tpu.memory_space<vmem>>, %arg5: memref<32x6xf32, #tpu.memory_space<vmem>>, %arg6: memref<32x1xf32, #tpu.memory_space<vmem>>, %arg7: memref<32x32xf32, #tpu.memory_space<vmem>>, %arg8: memref<32x1xf32, #tpu.memory_space<vmem>>, %arg9: memref<32x1xf32, #tpu.memory_space<vmem>>, %arg10: memref<16x128xf32, #tpu.memory_space<vmem>>) attributes {dimension_semantics = [#tpu.dimension_semantics<parallel>], iteration_bounds = array<i64: 1>, scalar_prefetch = 0 : i64, scratch_operands = 0 : i64, tpu.core_type = #tpu.core_type<tc>, window_params = [{transform_indices = @transform_0, window_bounds = array<i64: 16>}, {transform_indices = @transform_1, window_bounds = array<i64: 1>}, {transform_indices = @transform_2, window_bounds = array<i64: 1, 128>}, {transform_indices = @transform_3, window_bounds = array<i64: 3, 128>}, {pipeline_mode = #tpu.pipeline_mode<synchronous>, transform_indices = @transform_4, window_bounds = array<i64: 32, 6>}, {pipeline_mode = #tpu.pipeline_mode<synchronous>, transform_indices = @transform_5, window_bounds = array<i64: 32, 1>}, {pipeline_mode = #tpu.pipeline_mode<synchronous>, transform_indices = @transform_6, window_bounds = array<i64: 32, 32>}, {pipeline_mode = #tpu.pipeline_mode<synchronous>, transform_indices = @transform_7, window_bounds = array<i64: 32, 1>}, {pipeline_mode = #tpu.pipeline_mode<synchronous>, transform_indices = @transform_8, window_bounds = array<i64: 32, 1>}, {transform_indices = @transform_9, window_bounds = array<i64: 16, 128>}]} {
    %c0 = arith.constant 0 : index
    %c0_0 = arith.constant 0 : index
    %0 = vector.load %arg4[%c0, %c0_0] : memref<3x128xf32, #tpu.memory_space<vmem>>, vector<3x128xf32>
    %1 = vector.extract_strided_slice %0 {offsets = [1, 0], sizes = [1, 128], strides = [1, 1]} : vector<3x128xf32> to vector<1x128xf32>
    %2 = vector.extract_strided_slice %0 {offsets = [2, 0], sizes = [1, 128], strides = [1, 1]} : vector<3x128xf32> to vector<1x128xf32>
    %c0_1 = arith.constant 0 : index
    %c0_2 = arith.constant 0 : index
    %3 = vector.load %arg5[%c0_1, %c0_2] : memref<32x6xf32, #tpu.memory_space<vmem>>, vector<32x6xf32>
    %4 = arith.truncf %3 : vector<32x6xf32> to vector<32x6xbf16>
    %c0_3 = arith.constant 0 : index
    %c0_4 = arith.constant 0 : index
    %5 = vector.load %arg7[%c0_3, %c0_4] : memref<32x32xf32, #tpu.memory_space<vmem>>, vector<32x32xf32>
    %6 = arith.truncf %5 : vector<32x32xf32> to vector<32x32xbf16>
    %c0_5 = arith.constant 0 : index
    %c0_6 = arith.constant 0 : index
    %7 = vector.load %arg6[%c0_5, %c0_6] : memref<32x1xf32, #tpu.memory_space<vmem>>, vector<32x1xf32>
    %8 = vector.shape_cast %7 : vector<32x1xf32> to vector<32x1xf32>
    %9 = vector.broadcast %8 : vector<32x1xf32> to vector<32x128xf32>
    %c0_7 = arith.constant 0 : index
    %c0_8 = arith.constant 0 : index
    %10 = vector.load %arg8[%c0_7, %c0_8] : memref<32x1xf32, #tpu.memory_space<vmem>>, vector<32x1xf32>
    %11 = vector.shape_cast %10 : vector<32x1xf32> to vector<32x1xf32>
    %12 = vector.broadcast %11 : vector<32x1xf32> to vector<32x128xf32>
    %c0_9 = arith.constant 0 : index
    %c0_10 = arith.constant 0 : index
    %13 = vector.load %arg9[%c0_9, %c0_10] : memref<32x1xf32, #tpu.memory_space<vmem>>, vector<32x1xf32>
    %14 = vector.shape_cast %13 : vector<32x1xf32> to vector<32x1xf32>
    %15 = vector.broadcast %14 : vector<32x1xf32> to vector<32x128xf32>
    %c0_11 = arith.constant 0 : index
    %16 = memref.load %arg2[%c0_11] : memref<1xf32, #tpu.memory_space<smem>>
    %c0_12 = arith.constant 0 : index
    %c0_13 = arith.constant 0 : index
    %17 = vector.load %arg3[%c0_12, %c0_13] : memref<1x128xf32, #tpu.memory_space<vmem>>, vector<1x128xf32>
    %cst = arith.constant 0.000000e+00 : f32
    %18 = vector.broadcast %cst : f32 to vector<1x128xf32>
    %19 = tpu.concatenate %17, %18 in 0 : vector<1x128xf32>, vector<1x128xf32> -> vector<2x128xf32>
    %c0_14 = arith.constant 0 : index
    %c0_15 = arith.constant 0 : index
    %20 = vector.load %arg10[%c0_14, %c0_15] : memref<16x128xf32, #tpu.memory_space<vmem>>, vector<1x128xf32>
    tpu.vector_store %arg10[%c0_14, %c0_15], %17 {strides = array<i32>} : memref<16x128xf32, #tpu.memory_space<vmem>>, vector<1x128xf32>,
    %c0_i32 = arith.constant 0 : i32
    %c5_i32 = arith.constant 5 : i32
    %21 = arith.addi %c0_i32, %c5_i32 : i32
    %c1_i32 = arith.constant 1 : i32
    %22 = scf.for %arg11 = %c0_i32 to %21 step %c1_i32 iter_args(%arg12 = %19) -> (vector<2x128xf32>)  : i32 {
      %c3_i32 = arith.constant 3 : i32
      %23 = arith.muli %arg11, %c3_i32 : i32
      %c0_i32_17 = arith.constant 0 : i32
      %24 = arith.addi %23, %c0_i32_17 : i32
      %25 = arith.index_cast %24 : i32 to index
      %26 = memref.load %arg1[%25] : memref<16xf32, #tpu.memory_space<smem>>
      %c1_i32_18 = arith.constant 1 : i32
      %27 = arith.addi %24, %c1_i32_18 : i32
      %28 = arith.index_cast %27 : i32 to index
      %29 = memref.load %arg1[%28] : memref<16xf32, #tpu.memory_space<smem>>
      %30 = arith.index_cast %24 : i32 to index
      %31 = memref.load %arg1[%30] : memref<16xf32, #tpu.memory_space<smem>>
      %32 = arith.subf %29, %31 : f32
      %33 = vector.broadcast %26 : f32 to vector<1x128xf32>
      %34 = tpu.concatenate %arg12, %33, %0 in 0 : vector<2x128xf32>, vector<1x128xf32>, vector<3x128xf32> -> vector<6x128xf32>
      %35 = arith.truncf %34 : vector<6x128xf32> to vector<6x128xbf16>
      %cst_19 = arith.constant dense<0.000000e+00> : vector<32x128xf32>
      %36 = tpu.matmul %4, %35, %cst_19 {dimension_numbers = #tpu.dot_dimension_numbers<[1], [0], [0], [1], [0, 0, 1, 1], [], []>} : vector<32x6xbf16>, vector<6x128xbf16>, vector<32x128xf32> -> vector<32x128xf32>
      %37 = arith.addf %36, %9 : vector<32x128xf32>
      %38 = math.tanh %37 : vector<32x128xf32>
      %39 = arith.truncf %38 : vector<32x128xf32> to vector<32x128xbf16>
      %cst_20 = arith.constant dense<0.000000e+00> : vector<32x128xf32>
      %40 = tpu.matmul %6, %39, %cst_20 {dimension_numbers = #tpu.dot_dimension_numbers<[1], [0], [0], [1], [0, 0, 1, 1], [], []>} : vector<32x32xbf16>, vector<32x128xbf16>, vector<32x128xf32> -> vector<32x128xf32>
      %41 = arith.addf %40, %12 : vector<32x128xf32>
      %42 = math.tanh %41 : vector<32x128xf32>
      %43 = arith.mulf %15, %42 : vector<32x128xf32>
      %cst_21 = arith.constant dense<0.000000e+00> : vector<128xf32>
      %44 = vector.multi_reduction <add>, %43, %cst_21 [0] : vector<32x128xf32> to vector<128xf32>
      %45 = vector.shape_cast %44 : vector<128xf32> to vector<1x128xf32>
      %46 = vector.broadcast %16 : f32 to vector<1x128xf32>
      %47 = arith.addf %45, %46 : vector<1x128xf32>
      %48 = vector.extract_strided_slice %arg12 {offsets = [0, 0], sizes = [1, 128], strides = [1, 1]} : vector<2x128xf32> to vector<1x128xf32>
      %49 = vector.extract_strided_slice %arg12 {offsets = [1, 0], sizes = [1, 128], strides = [1, 1]} : vector<2x128xf32> to vector<1x128xf32>
      %cst_22 = arith.constant 0.000000e+00 : f32
      %50 = vector.broadcast %cst_22 : f32 to vector<1x128xf32>
      %51 = arith.subf %50, %1 : vector<1x128xf32>
      %52 = math.sin %48 : vector<1x128xf32>
      %53 = arith.mulf %51, %52 : vector<1x128xf32>
      %54 = arith.mulf %2, %49 : vector<1x128xf32>
      %55 = arith.subf %53, %54 : vector<1x128xf32>
      %56 = arith.addf %55, %47 : vector<1x128xf32>
      %57 = tpu.concatenate %49, %56 in 0 : vector<1x128xf32>, vector<1x128xf32> -> vector<2x128xf32>
      %58 = vector.broadcast %32 : f32 to vector<2x128xf32>
      %59 = arith.mulf %58, %57 : vector<2x128xf32>
      %60 = arith.addf %arg12, %59 : vector<2x128xf32>
      %61 = vector.extract_strided_slice %60 {offsets = [0, 0], sizes = [1, 128], strides = [1, 1]} : vector<2x128xf32> to vector<1x128xf32>
      %c1_i32_23 = arith.constant 1 : i32
      %62 = arith.addi %24, %c1_i32_23 : i32
      %63 = arith.index_cast %62 : i32 to index
      %c0_24 = arith.constant 0 : index
      %64 = vector.load %arg10[%63, %c0_24] : memref<16x128xf32, #tpu.memory_space<vmem>>, vector<1x128xf32>
      tpu.vector_store %arg10[%63, %c0_24], %61 {strides = array<i32>} : memref<16x128xf32, #tpu.memory_space<vmem>>, vector<1x128xf32>,
      %c1_i32_25 = arith.constant 1 : i32
      %65 = arith.addi %23, %c1_i32_25 : i32
      %66 = arith.index_cast %65 : i32 to index
      %67 = memref.load %arg1[%66] : memref<16xf32, #tpu.memory_space<smem>>
      %c1_i32_26 = arith.constant 1 : i32
      %68 = arith.addi %65, %c1_i32_26 : i32
      %69 = arith.index_cast %68 : i32 to index
      %70 = memref.load %arg1[%69] : memref<16xf32, #tpu.memory_space<smem>>
      %71 = arith.index_cast %65 : i32 to index
      %72 = memref.load %arg1[%71] : memref<16xf32, #tpu.memory_space<smem>>
      %73 = arith.subf %70, %72 : f32
      %74 = vector.broadcast %67 : f32 to vector<1x128xf32>
      %75 = tpu.concatenate %60, %74, %0 in 0 : vector<2x128xf32>, vector<1x128xf32>, vector<3x128xf32> -> vector<6x128xf32>
      %76 = arith.truncf %75 : vector<6x128xf32> to vector<6x128xbf16>
      %cst_27 = arith.constant dense<0.000000e+00> : vector<32x128xf32>
      %77 = tpu.matmul %4, %76, %cst_27 {dimension_numbers = #tpu.dot_dimension_numbers<[1], [0], [0], [1], [0, 0, 1, 1], [], []>} : vector<32x6xbf16>, vector<6x128xbf16>, vector<32x128xf32> -> vector<32x128xf32>
      %78 = arith.addf %77, %9 : vector<32x128xf32>
      %79 = math.tanh %78 : vector<32x128xf32>
      %80 = arith.truncf %79 : vector<32x128xf32> to vector<32x128xbf16>
      %cst_28 = arith.constant dense<0.000000e+00> : vector<32x128xf32>
      %81 = tpu.matmul %6, %80, %cst_28 {dimension_numbers = #tpu.dot_dimension_numbers<[1], [0], [0], [1], [0, 0, 1, 1], [], []>} : vector<32x32xbf16>, vector<32x128xbf16>, vector<32x128xf32> -> vector<32x128xf32>
      %82 = arith.addf %81, %12 : vector<32x128xf32>
      %83 = math.tanh %82 : vector<32x128xf32>
      %84 = arith.mulf %15, %83 : vector<32x128xf32>
      %cst_29 = arith.constant dense<0.000000e+00> : vector<128xf32>
      %85 = vector.multi_reduction <add>, %84, %cst_29 [0] : vector<32x128xf32> to vector<128xf32>
      %86 = vector.shape_cast %85 : vector<128xf32> to vector<1x128xf32>
      %87 = vector.broadcast %16 : f32 to vector<1x128xf32>
      %88 = arith.addf %86, %87 : vector<1x128xf32>
      %89 = vector.extract_strided_slice %60 {offsets = [0, 0], sizes = [1, 128], strides = [1, 1]} : vector<2x128xf32> to vector<1x128xf32>
      %90 = vector.extract_strided_slice %60 {offsets = [1, 0], sizes = [1, 128], strides = [1, 1]} : vector<2x128xf32> to vector<1x128xf32>
      %cst_30 = arith.constant 0.000000e+00 : f32
      %91 = vector.broadcast %cst_30 : f32 to vector<1x128xf32>
      %92 = arith.subf %91, %1 : vector<1x128xf32>
      %93 = math.sin %89 : vector<1x128xf32>
      %94 = arith.mulf %92, %93 : vector<1x128xf32>
      %95 = arith.mulf %2, %90 : vector<1x128xf32>
      %96 = arith.subf %94, %95 : vector<1x128xf32>
      %97 = arith.addf %96, %88 : vector<1x128xf32>
      %98 = tpu.concatenate %90, %97 in 0 : vector<1x128xf32>, vector<1x128xf32> -> vector<2x128xf32>
      %99 = vector.broadcast %73 : f32 to vector<2x128xf32>
      %100 = arith.mulf %99, %98 : vector<2x128xf32>
      %101 = arith.addf %60, %100 : vector<2x128xf32>
      %102 = vector.extract_strided_slice %101 {offsets = [0, 0], sizes = [1, 128], strides = [1, 1]} : vector<2x128xf32> to vector<1x128xf32>
      %c1_i32_31 = arith.constant 1 : i32
      %103 = arith.addi %65, %c1_i32_31 : i32
      %104 = arith.index_cast %103 : i32 to index
      %c0_32 = arith.constant 0 : index
      %105 = vector.load %arg10[%104, %c0_32] : memref<16x128xf32, #tpu.memory_space<vmem>>, vector<1x128xf32>
      tpu.vector_store %arg10[%104, %c0_32], %102 {strides = array<i32>} : memref<16x128xf32, #tpu.memory_space<vmem>>, vector<1x128xf32>,
      %c2_i32 = arith.constant 2 : i32
      %106 = arith.addi %23, %c2_i32 : i32
      %107 = arith.index_cast %106 : i32 to index
      %108 = memref.load %arg1[%107] : memref<16xf32, #tpu.memory_space<smem>>
      %c1_i32_33 = arith.constant 1 : i32
      %109 = arith.addi %106, %c1_i32_33 : i32
      %110 = arith.index_cast %109 : i32 to index
      %111 = memref.load %arg1[%110] : memref<16xf32, #tpu.memory_space<smem>>
      %112 = arith.index_cast %106 : i32 to index
      %113 = memref.load %arg1[%112] : memref<16xf32, #tpu.memory_space<smem>>
      %114 = arith.subf %111, %113 : f32
      %115 = vector.broadcast %108 : f32 to vector<1x128xf32>
      %116 = tpu.concatenate %101, %115, %0 in 0 : vector<2x128xf32>, vector<1x128xf32>, vector<3x128xf32> -> vector<6x128xf32>
      %117 = arith.truncf %116 : vector<6x128xf32> to vector<6x128xbf16>
      %cst_34 = arith.constant dense<0.000000e+00> : vector<32x128xf32>
      %118 = tpu.matmul %4, %117, %cst_34 {dimension_numbers = #tpu.dot_dimension_numbers<[1], [0], [0], [1], [0, 0, 1, 1], [], []>} : vector<32x6xbf16>, vector<6x128xbf16>, vector<32x128xf32> -> vector<32x128xf32>
      %119 = arith.addf %118, %9 : vector<32x128xf32>
      %120 = math.tanh %119 : vector<32x128xf32>
      %121 = arith.truncf %120 : vector<32x128xf32> to vector<32x128xbf16>
      %cst_35 = arith.constant dense<0.000000e+00> : vector<32x128xf32>
      %122 = tpu.matmul %6, %121, %cst_35 {dimension_numbers = #tpu.dot_dimension_numbers<[1], [0], [0], [1], [0, 0, 1, 1], [], []>} : vector<32x32xbf16>, vector<32x128xbf16>, vector<32x128xf32> -> vector<32x128xf32>
      %123 = arith.addf %122, %12 : vector<32x128xf32>
      %124 = math.tanh %123 : vector<32x128xf32>
      %125 = arith.mulf %15, %124 : vector<32x128xf32>
      %cst_36 = arith.constant dense<0.000000e+00> : vector<128xf32>
      %126 = vector.multi_reduction <add>, %125, %cst_36 [0] : vector<32x128xf32> to vector<128xf32>
      %127 = vector.shape_cast %126 : vector<128xf32> to vector<1x128xf32>
      %128 = vector.broadcast %16 : f32 to vector<1x128xf32>
      %129 = arith.addf %127, %128 : vector<1x128xf32>
      %130 = vector.extract_strided_slice %101 {offsets = [0, 0], sizes = [1, 128], strides = [1, 1]} : vector<2x128xf32> to vector<1x128xf32>
      %131 = vector.extract_strided_slice %101 {offsets = [1, 0], sizes = [1, 128], strides = [1, 1]} : vector<2x128xf32> to vector<1x128xf32>
      %cst_37 = arith.constant 0.000000e+00 : f32
      %132 = vector.broadcast %cst_37 : f32 to vector<1x128xf32>
      %133 = arith.subf %132, %1 : vector<1x128xf32>
      %134 = math.sin %130 : vector<1x128xf32>
      %135 = arith.mulf %133, %134 : vector<1x128xf32>
      %136 = arith.mulf %2, %131 : vector<1x128xf32>
      %137 = arith.subf %135, %136 : vector<1x128xf32>
      %138 = arith.addf %137, %129 : vector<1x128xf32>
      %139 = tpu.concatenate %131, %138 in 0 : vector<1x128xf32>, vector<1x128xf32> -> vector<2x128xf32>
      %140 = vector.broadcast %114 : f32 to vector<2x128xf32>
      %141 = arith.mulf %140, %139 : vector<2x128xf32>
      %142 = arith.addf %101, %141 : vector<2x128xf32>
      %143 = vector.extract_strided_slice %142 {offsets = [0, 0], sizes = [1, 128], strides = [1, 1]} : vector<2x128xf32> to vector<1x128xf32>
      %c1_i32_38 = arith.constant 1 : i32
      %144 = arith.addi %106, %c1_i32_38 : i32
      %145 = arith.index_cast %144 : i32 to index
      %c0_39 = arith.constant 0 : index
      %146 = vector.load %arg10[%145, %c0_39] : memref<16x128xf32, #tpu.memory_space<vmem>>, vector<1x128xf32>
      tpu.vector_store %arg10[%145, %c0_39], %143 {strides = array<i32>} : memref<16x128xf32, #tpu.memory_space<vmem>>, vector<1x128xf32>,
      scf.yield %142 : vector<2x128xf32>
    }
    %c5_i32_16 = arith.constant 5 : i32
    return
  }
  func.func @transform_0(%arg0: i32) -> i32 {
    %c0_i32 = arith.constant 0 : i32
    %c0_i32_0 = arith.constant 0 : i32
    return %c0_i32 : i32
  }
  func.func @transform_1(%arg0: i32) -> i32 {
    %c0_i32 = arith.constant 0 : i32
    %c0_i32_0 = arith.constant 0 : i32
    return %c0_i32 : i32
  }
  func.func @transform_2(%arg0: i32) -> (i32, i32) {
    %c0_i32 = arith.constant 0 : i32
    %c0_i32_0 = arith.constant 0 : i32
    return %c0_i32, %arg0 : i32, i32
  }
  func.func @transform_3(%arg0: i32) -> (i32, i32) {
    %c0_i32 = arith.constant 0 : i32
    %c0_i32_0 = arith.constant 0 : i32
    return %c0_i32, %arg0 : i32, i32
  }
  func.func @transform_4(%arg0: i32) -> (i32, i32) {
    %c0_i32 = arith.constant 0 : i32
    %c0_i32_0 = arith.constant 0 : i32
    %c0_i32_1 = arith.constant 0 : i32
    return %c0_i32, %c0_i32_0 : i32, i32
  }
  func.func @transform_5(%arg0: i32) -> (i32, i32) {
    %c0_i32 = arith.constant 0 : i32
    %c0_i32_0 = arith.constant 0 : i32
    %c0_i32_1 = arith.constant 0 : i32
    return %c0_i32, %c0_i32_0 : i32, i32
  }
  func.func @transform_6(%arg0: i32) -> (i32, i32) {
    %c0_i32 = arith.constant 0 : i32
    %c0_i32_0 = arith.constant 0 : i32
    %c0_i32_1 = arith.constant 0 : i32
    return %c0_i32, %c0_i32_0 : i32, i32
  }
  func.func @transform_7(%arg0: i32) -> (i32, i32) {
    %c0_i32 = arith.constant 0 : i32
    %c0_i32_0 = arith.constant 0 : i32
    %c0_i32_1 = arith.constant 0 : i32
    return %c0_i32, %c0_i32_0 : i32, i32
  }
  func.func @transform_8(%arg0: i32) -> (i32, i32) {
    %c0_i32 = arith.constant 0 : i32
    %c0_i32_0 = arith.constant 0 : i32
    %c0_i32_1 = arith.constant 0 : i32
    return %c0_i32, %c0_i32_0 : i32, i32
  }
  func.func @transform_9(%arg0: i32) -> (i32, i32) {
    %c0_i32 = arith.constant 0 : i32
    %c0_i32_0 = arith.constant 0 : i32
    return %c0_i32, %arg0 : i32, i32
  }
}

</mosaic_0001>

<llo_original>
// kernel: tpu_custom_call.1
$region0: #{tpu_custom_call.1}
  #allocation0 [shape = 'u32[]', space=smem, size = 0x4, offset = 0x4, fixed_abs, tag = 'smem constant byte address 0x4 - core index']
  #allocation1 [shape = 'u32[144,128]{1,0:T(1,128)}', space=vmem, size = 0x12000, scoped, tag = 'internal scratch']
  #allocation2 [shape = 'f32[1]{0:T(128)S(6)}', space=smem, size = 0x200, scoped, tag = 'scoped memory for tpu_custom_call.1']
  %s0 = inlined_call_operand.vmem [shape: f32[16], index: 0, kind: input, shape index: {}]
  %s1 = inlined_call_operand.<no memory space> [shape: f32[1], index: 1, kind: input, shape index: {}]
  %s2 = inlined_call_operand.vmem [shape: f32[1,128], index: 2, kind: input, shape index: {}]
  %s3 = inlined_call_operand.vmem [shape: f32[3,128], index: 3, kind: input, shape index: {}]
  %s4 = inlined_call_operand.vmem [shape: f32[32,6], index: 4, kind: input, shape index: {}]
  %s5 = inlined_call_operand.vmem [shape: f32[32,1], index: 5, kind: input, shape index: {}]
  %s6 = inlined_call_operand.vmem [shape: f32[32,32], index: 6, kind: input, shape index: {}]
  %s7 = inlined_call_operand.vmem [shape: f32[32,1], index: 7, kind: input, shape index: {}]
  %s8 = inlined_call_operand.vmem [shape: f32[32,1], index: 8, kind: input, shape index: {}]
  %s9 = inlined_call_operand.hbm [shape: f32[16,128], index: 9, kind: output, shape index: {}]
  %s10 = sld [smem:[#allocation0]]
  $region57: #{tpu_custom_call.1} parent=0
    _
  %s12 = ssub.s32 1, %s10
  %s13 = scalar_select 0, %s12, %s10
  %14 = sst [smem:[#allocation2]] %s1
  $region1: #{tpu_custom_call.1} parent=0
    #allocation3 [shape = 'u8[512]{0}', space=smem, size = 0x200, scoped, tag = 'input window, operand 0, single buffered']
    #allocation4 [shape = 's32[1]{0}', space=sflag, size = 0x4, scoped, tag = 'scoped memory for tpu_custom_call.1']
    #allocation5 [shape = 's32[1]{0}', space=sflag, size = 0x4, scoped, tag = 'scoped memory for tpu_custom_call.1']
    #allocation6 [shape = 'u8[8192]{0}', space=vmem, size = 0x2000, scoped, tag = 'output window, operand 0, single buffered']
    %15 = vsyncpa [#allocation5], 0
    %16 = vsyncpa [#allocation4], 0
    // Predicated region
    $region2: #{tpu_custom_call.1} parent=1 // pred_check
      _
    $region3: #{tpu_custom_call.1} parent=1 // pred_check_branch
      %18 = sbr.rel (0) target = $region5
    $region4: #{tpu_custom_call.1} parent=1 // pred_region
      %s20 = ssub.s32 16, 16
      %21 = vsyncadd [#allocation5], %s20
      %s23 = sshll.u32 %s0, 4
      %s24 = int_to_ptr.vmem [resolvable:$true] %s23
      %26 = dma.vmem_to_smem %s24, 16, [#allocation3], [#allocation5]
    $region5: #{tpu_custom_call.1} parent=1 // pred_fallthru
      _
    // Predicated region
    $region6: #{tpu_custom_call.1} parent=1 // pred_check
      _
    $region7: #{tpu_custom_call.1} parent=1 // pred_check_branch
      %28 = sbr.rel (0) target = $region9
    $region8: #{tpu_custom_call.1} parent=1 // pred_region
      _
    $region9: #{tpu_custom_call.1} parent=1 // pred_fallthru
      _
    // Predicated region
    $region10: #{tpu_custom_call.1} parent=1 // pred_check
      _
    $region11: #{tpu_custom_call.1} parent=1 // pred_check_branch
      %30 = sbr.rel (0) target = $region13
    $region12: #{tpu_custom_call.1} parent=1 // pred_region
      _
    $region13: #{tpu_custom_call.1} parent=1 // pred_fallthru
      _
    // Predicated region
    $region14: #{tpu_custom_call.1} parent=1 // pred_check
      _
    $region15: #{tpu_custom_call.1} parent=1 // pred_check_branch
      %32 = sbr.rel (0) target = $region17
    $region16: #{tpu_custom_call.1} parent=1 // pred_region
      _
    $region17: #{tpu_custom_call.1} parent=1 // pred_fallthru
      _
    // Predicated region
    $region18: #{tpu_custom_call.1} parent=1 // pred_check
      _
    $region19: #{tpu_custom_call.1} parent=1 // pred_check_branch
      %34 = sbr.rel (0) target = $region21
    $region20: #{tpu_custom_call.1} parent=1 // pred_region
      _
    $region21: #{tpu_custom_call.1} parent=1 // pred_fallthru
      _
    // Predicated region
    $region22: #{tpu_custom_call.1} parent=1 // pred_check
      _
    $region23: #{tpu_custom_call.1} parent=1 // pred_check_branch
      %36 = sbr.rel (0) target = $region25
    $region24: #{tpu_custom_call.1} parent=1 // pred_region
      _
    $region25: #{tpu_custom_call.1} parent=1 // pred_fallthru
      _
    // Predicated region
    $region26: #{tpu_custom_call.1} parent=1 // pred_check
      _
    $region27: #{tpu_custom_call.1} parent=1 // pred_check_branch
      %38 = sbr.rel (0) target = $region29
    $region28: #{tpu_custom_call.1} parent=1 // pred_region
      _
    $region29: #{tpu_custom_call.1} parent=1 // pred_fallthru
      _
    // Predicated region
    $region30: #{tpu_custom_call.1} parent=1 // pred_check
      _
    $region31: #{tpu_custom_call.1} parent=1 // pred_check_branch
      %40 = sbr.rel (0) target = $region33
    $region32: #{tpu_custom_call.1} parent=1 // pred_region
      _
    $region33: #{tpu_custom_call.1} parent=1 // pred_fallthru
      _
    // Predicated region
    $region34: #{tpu_custom_call.1} parent=1 // pred_check
      _
    $region35: #{tpu_custom_call.1} parent=1 // pred_check_branch
      %42 = sbr.rel (0) target = $region37
    $region36: #{tpu_custom_call.1} parent=1 // pred_region
      _
    $region37: #{tpu_custom_call.1} parent=1 // pred_fallthru
      _
    // Predicated region
    $region38: #{tpu_custom_call.1} parent=1 // pred_check
      _
    $region39: #{tpu_custom_call.1} parent=1 // pred_check_branch
      %44 = sbr.rel (0) target = $region41
    $region40: #{tpu_custom_call.1} parent=1 // pred_region
      %45 = dma.done [#allocation5], 16
    $region41: #{tpu_custom_call.1} parent=1 // pred_fallthru
      _
    %46 = sfence
    %v48 = vld [vmem:[%s3] sm:$0x7]
    %v49 = vld [vmem:[%s4] sm:$0xff]
    %v50 = vld [vmem:[%s4 + $0x8] sm:$0xff]
    %v51 = vld [vmem:[%s4 + $0x10] sm:$0xff]
    %v52 = vld [vmem:[%s4 + $0x18] sm:$0xff]
    %v53 = vpack.c.bf16 %v50, %v49
    %v54 = vpack.c.bf16 %v52, %v51
    %v55 = vld [vmem:[%s6] sm:$0xff]
    %v56 = vld [vmem:[%s6 + $0x8] sm:$0xff]
    %v57 = vld [vmem:[%s6 + $0x10] sm:$0xff]
    %v58 = vld [vmem:[%s6 + $0x18] sm:$0xff]
    %v59 = vpack.c.bf16 %v56, %v55
    %v60 = vpack.c.bf16 %v58, %v57
    %v61 = vld [vmem:[%s5] sm:$0xff]
    %v62 = vld [vmem:[%s5 + $0x8] sm:$0xff]
    %v63 = vld [vmem:[%s5 + $0x10] sm:$0xff]
    %v64 = vld [vmem:[%s5 + $0x18] sm:$0xff]
    %66 = vset.pattern.permute.xlu0 0
    %67 = vperm.xlu0 %66, %v61
    %v68 = vpop.permute.xlu0 %67
    %71 = vset.pattern.permute.xlu0 0
    %72 = vperm.xlu0 %71, %v62
    %v73 = vpop.permute.xlu0 %72
    %76 = vset.pattern.permute.xlu0 0
    %77 = vperm.xlu0 %76, %v63
    %v78 = vpop.permute.xlu0 %77
    %81 = vset.pattern.permute.xlu0 0
    %82 = vperm.xlu0 %81, %v64
    %v83 = vpop.permute.xlu0 %82
    %v85 = vld [vmem:[%s7] sm:$0xff]
    %v86 = vld [vmem:[%s7 + $0x8] sm:$0xff]
    %v87 = vld [vmem:[%s7 + $0x10] sm:$0xff]
    %v88 = vld [vmem:[%s7 + $0x18] sm:$0xff]
    %90 = vset.pattern.permute.xlu0 0
    %91 = vperm.xlu0 %90, %v85
    %v92 = vpop.permute.xlu0 %91
    %95 = vset.pattern.permute.xlu0 0
    %96 = vperm.xlu0 %95, %v86
    %v97 = vpop.permute.xlu0 %96
    %100 = vset.pattern.permute.xlu0 0
    %101 = vperm.xlu0 %100, %v87
    %v102 = vpop.permute.xlu0 %101
    %105 = vset.pattern.permute.xlu0 0
    %106 = vperm.xlu0 %105, %v88
    %v107 = vpop.permute.xlu0 %106
    %v109 = vld [vmem:[%s8] sm:$0xff]
    %v110 = vld [vmem:[%s8 + $0x8] sm:$0xff]
    %v111 = vld [vmem:[%s8 + $0x10] sm:$0xff]
    %v112 = vld [vmem:[%s8 + $0x18] sm:$0xff]
    %114 = vset.pattern.permute.xlu0 0
    %115 = vperm.xlu0 %114, %v109
    %v116 = vpop.permute.xlu0 %115
    %119 = vset.pattern.permute.xlu0 0
    %120 = vperm.xlu0 %119, %v110
    %v121 = vpop.permute.xlu0 %120
    %124 = vset.pattern.permute.xlu0 0
    %125 = vperm.xlu0 %124, %v111
    %v126 = vpop.permute.xlu0 %125
    %129 = vset.pattern.permute.xlu0 0
    %130 = vperm.xlu0 %129, %v112
    %v131 = vpop.permute.xlu0 %130
    %s133 = sld [smem:[#allocation2]]
    %v134 = vld [vmem:[%s2] sm:$0x1]
    %vm135 = vcmask 1040384
    %v136 = vsel %vm135, %v134, 0.0
    %137 = vst [vmem:[#allocation6] sm:$0x1] %v134
    loop: start=0, step=1, limit=5
    $region42: #{tpu_custom_call.1} parent=1 // loop_pre_header
      _
    $region43: #{tpu_custom_call.1} parent=1 // loop_header
      %s139 = sphi 0, %s143
      %p140 = scmp.ge.s32.totalorder %s139, 5
      %v144 = vphi %v136, %v938
    $region44: #{tpu_custom_call.1} parent=1 // loop_header_branch
      %142 = sbr.rel (%p140) target = $region48
    $region45: #{tpu_custom_call.1} parent=1 // loop_body
      %s145 = smul.u32 %s139, 3
      %s146 = sld [smem:[#allocation3 + %s145]]
      %s147 = sadd.s32 %s145, 1
      %s148 = sld [smem:[#allocation3 + %s147]]
      %s149 = ssub.f32 %s148, %s146
      %v150 = vstv %s146
      %v152 = vrot.slane %v48, 5
      %vm154 = vcmask 1041408
      %v155 = vsel %vm154, %v144, %v150
      %vm156 = vcmask 1042432
      %v157 = vsel %vm156, %v155, %v152
      %v158 = vpack.c.bf16 %v157, %v157
      %vm159 = vcmask 48128
      %v161 = vsel %vm159, %v53, 0
      %v164 = vsel %vm159, %v54, 0
      %v167 = vsel %vm156, %v158, 0
      %169 = vmatprep.subr.bf16.mxu0 0
      %170 = vmatpush1.bf16.msra.mxu0 %v167
      %171 = vmatprep.subr.bf16.mxu0 0
      %172 = vmatpush1.bf16.msra.mxu0 0
      %173 = vmatprep.subr.bf16.mxu0 0
      %174 = vmatpush1.bf16.msra.mxu0 0
      %175 = vmatprep.subr.bf16.mxu0 0
      %176 = vmatpush1.bf16.msra.mxu0 0
      %177 = vmatprep.subr.bf16.mxu0 0
      %178 = vmatpush1.bf16.msra.mxu0 0
      %179 = vmatprep.subr.bf16.mxu0 0
      %180 = vmatpush1.bf16.msra.mxu0 0
      %181 = vmatprep.subr.bf16.mxu0 0
      %182 = vmatpush1.bf16.msra.mxu0 0
      %183 = vmatprep.subr.bf16.mxu0 0
      %184 = vmatpush1.bf16.msra.mxu0 0
      %185 = vmatprep.subr.bf16.mxu0 0
      %186 = vmatpush1.bf16.msra.mxu0 0
      %187 = vmatprep.subr.bf16.mxu0 0
      %188 = vmatpush1.bf16.msra.mxu0 0
      %189 = vmatprep.subr.bf16.mxu0 0
      %190 = vmatpush1.bf16.msra.mxu0 0
      %191 = vmatprep.subr.bf16.mxu0 0
      %192 = vmatpush1.bf16.msra.mxu0 0
      %193 = vmatprep.subr.bf16.mxu0 0
      %194 = vmatpush1.bf16.msra.mxu0 0
      %195 = vmatprep.subr.bf16.mxu0 0
      %196 = vmatpush1.bf16.msra.mxu0 0
      %197 = vmatprep.subr.bf16.mxu0 0
      %198 = vmatpush1.bf16.msra.mxu0 0
      %199 = vmatprep.subr.bf16.mxu0 0
      %200 = vmatpush1.bf16.msra.mxu0 0
      %201 = vmatprep.mubr.bf16.mxu0 0
      %202 = vmatmul.mubr.bf16.gmra.mrb[0].mxu0 %v161
      %v203 = vpop.f32.mrb[0].mxu0
      %v204 = vadd.f32 %v68, %v203
      %v205 = vpop.f32.mrb[0].mxu0
      %v206 = vpop.f32.mrb[0].mxu0
      %v207 = vadd.f32 %v73, %v206
      %v208 = vpop.f32.mrb[0].mxu0
      %209 = vmatprep.mubr.bf16.mxu0 0
      %210 = vmatmul.mubr.bf16.gmra.mrb[0].mxu0 %v164
      %v211 = vpop.f32.mrb[0].mxu0
      %v212 = vadd.f32 %v78, %v211
      %v213 = vpop.f32.mrb[0].mxu0
      %v214 = vpop.f32.mrb[0].mxu0
      %v215 = vadd.f32 %v83, %v214
      %v216 = vpop.f32.mrb[0].mxu0
      %217 = vdwg.mxu0
      %v218 = vtanh.pop %v204
      %v219 = vtanh.pop %v207
      %v220 = vtanh.pop %v212
      %v221 = vtanh.pop %v215
      %v222 = vpack.c.bf16 %v219, %v218
      %v223 = vpack.c.bf16 %v221, %v220
      %vm224 = vcmask 261120
      %v226 = vsel %vm224, %v59, 0
      %v229 = vsel %vm224, %v60, 0
      %231 = vmatprep.subr.bf16.mxu0 0
      %232 = vmatpush1.bf16.msra.mxu0 %v222
      %233 = vmatprep.subr.bf16.mxu0 0
      %234 = vmatpush1.bf16.msra.mxu0 %v223
      %235 = vmatprep.subr.bf16.mxu0 0
      %236 = vmatpush1.bf16.msra.mxu0 0
      %237 = vmatprep.subr.bf16.mxu0 0
      %238 = vmatpush1.bf16.msra.mxu0 0
      %239 = vmatprep.subr.bf16.mxu0 0
      %240 = vmatpush1.bf16.msra.mxu0 0
      %241 = vmatprep.subr.bf16.mxu0 0
      %242 = vmatpush1.bf16.msra.mxu0 0
      %243 = vmatprep.subr.bf16.mxu0 0
      %244 = vmatpush1.bf16.msra.mxu0 0
      %245 = vmatprep.subr.bf16.mxu0 0
      %246 = vmatpush1.bf16.msra.mxu0 0
      %247 = vmatprep.subr.bf16.mxu0 0
      %248 = vmatpush1.bf16.msra.mxu0 0
      %249 = vmatprep.subr.bf16.mxu0 0
      %250 = vmatpush1.bf16.msra.mxu0 0
      %251 = vmatprep.subr.bf16.mxu0 0
      %252 = vmatpush1.bf16.msra.mxu0 0
      %253 = vmatprep.subr.bf16.mxu0 0
      %254 = vmatpush1.bf16.msra.mxu0 0
      %255 = vmatprep.subr.bf16.mxu0 0
      %256 = vmatpush1.bf16.msra.mxu0 0
      %257 = vmatprep.subr.bf16.mxu0 0
      %258 = vmatpush1.bf16.msra.mxu0 0
      %259 = vmatprep.subr.bf16.mxu0 0
      %260 = vmatpush1.bf16.msra.mxu0 0
      %261 = vmatprep.subr.bf16.mxu0 0
      %262 = vmatpush1.bf16.msra.mxu0 0
      %263 = vmatprep.mubr.bf16.mxu0 0
      %264 = vmatmul.mubr.bf16.gmra.mrb[0].mxu0 %v226
      %v265 = vpop.f32.mrb[0].mxu0
      %v266 = vadd.f32 %v92, %v265
      %v267 = vpop.f32.mrb[0].mxu0
      %v268 = vpop.f32.mrb[0].mxu0
      %v269 = vadd.f32 %v97, %v268
      %v270 = vpop.f32.mrb[0].mxu0
      %271 = vmatprep.mubr.bf16.mxu0 0
      %272 = vmatmul.mubr.bf16.gmra.mrb[0].mxu0 %v229
      %v273 = vpop.f32.mrb[0].mxu0
      %v274 = vadd.f32 %v102, %v273
      %v275 = vpop.f32.mrb[0].mxu0
      %v276 = vpop.f32.mrb[0].mxu0
      %v277 = vadd.f32 %v107, %v276
      %v278 = vpop.f32.mrb[0].mxu0
      %279 = vdwg.mxu0
      %v280 = vtanh.pop %v266
      %v281 = vtanh.pop %v269
      %v282 = vtanh.pop %v274
      %v283 = vtanh.pop %v277
      %v284 = vmul.f32 %v116, %v280
      %v285 = vmul.f32 %v121, %v281
      %v286 = vmul.f32 %v126, %v282
      %v287 = vmul.f32 %v131, %v283
      %v288 = vadd.f32 %v284, %v285
      %v289 = vadd.f32 %v288, %v286
      %v290 = vadd.f32 %v289, %v287
      %v291 = vrot.slane %v290, 4
      %v292 = vadd.f32 %v290, %v291
      %v293 = vrot.slane %v292, 2
      %v294 = vadd.f32 %v292, %v293
      %v295 = vrot.slane %v294, 1
      %v296 = vadd.f32 %v294, %v295
      %v297 = vstv %s133
      %v298 = vadd.f32 %v296, %v297
      %v299 = vsub.f32 0.0, %v48
      %v300 = vand.u32 2147483647, %v144
      %vm301 = vcmp.le.f32.partialorder %v300, 0.7853982
      %vm302 = vcmp.lt.s32.totalorder %v144, 0
      %v303 = vand.u32 %v144, 2139095040
      %v304 = vshrl.u32 %v303, 23
      %v305 = vsub.s32 %v304, 127
      %v306 = vand.u32 2147483647, %v144
      %v307 = vand.u32 %v306, 8388607
      %v308 = vor.u32 %v307, 8388608
      %v309 = vsub.s32 0, %v308
      %v310 = vadd.s32 %v305, 1
      %vm311 = vcmp.gt.s32.totalorder %v310, 0
      %v312 = vsel %vm311, %v310, 0
      %v313 = vshrl.u32 %v312, 5
      %v314 = vand.u32 %v312, 31
      %v315 = vsub.s32 32, %v314
      %v316 = vshrl.u32 683565275, %v315
      %v317 = vshll.u32 683565275, %v314
      %v318 = vshrl.u32 2475754826, %v315
      %v319 = vor.u32 %v317, %v318
      %v320 = vshll.u32 2475754826, %v314
      %v321 = vshrl.u32 2131351028, %v315
      %v322 = vor.u32 %v320, %v321
      %v323 = vshll.u32 2131351028, %v314
      %v324 = vshrl.u32 2102212464, %v315
      %v325 = vor.u32 %v323, %v324
      %v326 = vshll.u32 2102212464, %v314
      %v327 = vshrl.u32 920167782, %v315
      %v328 = vor.u32 %v326, %v327
      %v329 = vshll.u32 920167782, %v314
      %v330 = vshrl.u32 1326507024, %v315
      %v331 = vor.u32 %v329, %v330
      %vm332 = vcmp.lt.s32.totalorder %v313, 1
      %vm333 = vcmp.lt.s32.totalorder %v313, 2
      %vm334 = vcmp.lt.s32.totalorder %v313, 3
      %vm335 = vcmp.lt.s32.totalorder %v313, 4
      %v336 = vsel %vm332, %v316, %v319
      %v337 = vsel %vm335, %v325, 2102212464
      %v338 = vsel %vm334, %v322, %v337
      %v339 = vsel %vm333, %v336, %v338
      %v340 = vsel %vm332, %v319, %v322
      %v341 = vsel %vm335, %v328, 920167782
      %v342 = vsel %vm334, %v325, %v341
      %v343 = vsel %vm333, %v340, %v342
      %v344 = vsel %vm332, %v322, %v325
      %v345 = vsel %vm335, %v331, 1326507024
      %v346 = vsel %vm334, %v328, %v345
      %v347 = vsel %vm333, %v344, %v346
      %v348 = vshll.u32 %v308, 8
      %v349 = vmul.u32.u64.compose %v348, %v347
      %v350 = vextract.low.u32 %v349
      %v351 = vextract.high.u32 %v349
      %v352 = vmul.u32.u64.compose %v348, %v343
      %v353 = vextract.low.u32 %v352
      %v354 = vextract.high.u32 %v352
      %v355 = vmul.u32 %v348, %v339
      %v356 = vadd.s32 %v351, %v353
      %vm357 = vc.u32 %v351, %v353
      %v358 = vadd.s32 %v354, 1
      %v359 = vsel %vm357, %v358, %v354
      %v360 = vadd.s32 %v355, %v359
      %v361 = vadd.s32 %v360, 536870912
      %v362 = vshrl.u32 %v361, 30
      %v363 = vshll.u32 %v362, 30
      %v364 = vsub.s32 %v360, %v363
      %vm365 = vcmp.lt.s32.totalorder %v364, 0
      %v366 = vsub.s32 0, %v364
      %v367 = vsel %vm365, %v366, %v364
      %v368 = vclz %v367
      %v369 = vsub.s32 %v368, 2
      %vm370 = vcmp.gt.s32.totalorder 0, %v369
      %v371 = vsel %vm370, 0, %v369
      %v372 = vsub.s32 32, %v371
      %v373 = vshll.u32 %v364, %v371
      %v374 = vshrl.u32 %v356, %v372
      %v375 = vor.u32 %v373, %v374
      %v376 = vsub.s32 4294967266, %v371
      %v377 = vadd.s32 %v376, 127
      %v378 = vshll.u32 %v377, 23
      %v379 = vor.u32 4788187, %v378
      %v380 = vand.u32 2147483647, %v379
      %v382 = vcvt.s32.f32 %v375
      %v383 = vmul.f32 %v382, %v380
      %v384 = vxor.u32 %v383, 2147483648
      %v385 = vsel %vm302, %v384, %v383
      %v386 = vsub.s32 4, %v362
      %v387 = vsel %vm302, %v386, %v362
      %v388 = vsel %vm301, %v144, %v385
      %v389 = vsel %vm301, 0, %v387
      %v390 = vcosq.f32.pop %v388
      %v391 = vsinq.f32.pop %v388
      %vm392 = vweird.f32 %v144
      %v393 = vadd.s32 %v389, 3
      %v394 = vand.u32 %v393, 3
      %vm395 = vcmp.lt.s32.totalorder %v394, 2
      %vm396 = vcmp.eq.s32.totalorder %v394, 0
      %v397 = vxor.u32 %v391, 2147483648
      %v398 = vsel %vm396, %v390, %v397
      %vm399 = vcmp.eq.s32.totalorder %v394, 2
      %v400 = vxor.u32 %v390, 2147483648
      %v401 = vsel %vm399, %v400, %v391
      %v402 = vsel %vm395, %v398, %v401
      %v403 = vsel %vm392, nan, %v402
      %v405 = vrot.slane %v403, 7
      %v407 = vmul.f32 %v299, %v405
      %v409 = vrot.slane %v144, 7
      %v411 = vmul.f32 %v48, %v409
      %v413 = vrot.slane %v411, 1
      %v415 = vsub.f32 %v407, %v413
      %v416 = vadd.f32 %v415, %v298
      %v417 = vrot.slane %v144, 1
      %v419 = vsel %vm135, %v417, %v416
      %v420 = vstv %s149
      %v421 = vmul.f32 %v420, %v419
      %v422 = vadd.f32 %v144, %v421
      %s423 = scalar_lea.vmem [#allocation6], %s147
      %424 = vst [vmem:[%s423] sm:$0x1] %v422
      %s425 = sld [smem:[#allocation3 + %s147]]
      %s426 = sadd.s32 %s145, 2
      %s427 = sld [smem:[#allocation3 + %s426]]
      %s428 = ssub.f32 %s427, %s425
      %v429 = vstv %s425
      %v430 = vsel %vm154, %v422, %v429
      %v431 = vsel %vm156, %v430, %v152
      %v432 = vpack.c.bf16 %v431, %v431
      %v434 = vsel %vm156, %v432, 0
      %436 = vmatprep.subr.bf16.mxu0 0
      %437 = vmatpush1.bf16.msra.mxu0 %v434
      %438 = vmatprep.subr.bf16.mxu0 0
      %439 = vmatpush1.bf16.msra.mxu0 0
      %440 = vmatprep.subr.bf16.mxu0 0
      %441 = vmatpush1.bf16.msra.mxu0 0
      %442 = vmatprep.subr.bf16.mxu0 0
      %443 = vmatpush1.bf16.msra.mxu0 0
      %444 = vmatprep.subr.bf16.mxu0 0
      %445 = vmatpush1.bf16.msra.mxu0 0
      %446 = vmatprep.subr.bf16.mxu0 0
      %447 = vmatpush1.bf16.msra.mxu0 0
      %448 = vmatprep.subr.bf16.mxu0 0
      %449 = vmatpush1.bf16.msra.mxu0 0
      %450 = vmatprep.subr.bf16.mxu0 0
      %451 = vmatpush1.bf16.msra.mxu0 0
      %452 = vmatprep.subr.bf16.mxu0 0
      %453 = vmatpush1.bf16.msra.mxu0 0
      %454 = vmatprep.subr.bf16.mxu0 0
      %455 = vmatpush1.bf16.msra.mxu0 0
      %456 = vmatprep.subr.bf16.mxu0 0
      %457 = vmatpush1.bf16.msra.mxu0 0
      %458 = vmatprep.subr.bf16.mxu0 0
      %459 = vmatpush1.bf16.msra.mxu0 0
      %460 = vmatprep.subr.bf16.mxu0 0
      %461 = vmatpush1.bf16.msra.mxu0 0
      %462 = vmatprep.subr.bf16.mxu0 0
      %463 = vmatpush1.bf16.msra.mxu0 0
      %464 = vmatprep.subr.bf16.mxu0 0
      %465 = vmatpush1.bf16.msra.mxu0 0
      %466 = vmatprep.subr.bf16.mxu0 0
      %467 = vmatpush1.bf16.msra.mxu0 0
      %468 = vmatprep.mubr.bf16.mxu0 0
      %469 = vmatmul.mubr.bf16.gmra.mrb[0].mxu0 %v161
      %v470 = vpop.f32.mrb[0].mxu0
      %v471 = vadd.f32 %v68, %v470
      %v472 = vpop.f32.mrb[0].mxu0
      %v473 = vpop.f32.mrb[0].mxu0
      %v474 = vadd.f32 %v73, %v473
      %v475 = vpop.f32.mrb[0].mxu0
      %476 = vmatprep.mubr.bf16.mxu0 0
      %477 = vmatmul.mubr.bf16.gmra.mrb[0].mxu0 %v164
      %v478 = vpop.f32.mrb[0].mxu0
      %v479 = vadd.f32 %v78, %v478
      %v480 = vpop.f32.mrb[0].mxu0
      %v481 = vpop.f32.mrb[0].mxu0
      %v482 = vadd.f32 %v83, %v481
      %v483 = vpop.f32.mrb[0].mxu0
      %484 = vdwg.mxu0
      %v485 = vtanh.pop %v471
      %v486 = vtanh.pop %v474
      %v487 = vtanh.pop %v479
      %v488 = vtanh.pop %v482
      %v489 = vpack.c.bf16 %v486, %v485
      %v490 = vpack.c.bf16 %v488, %v487
      %491 = vmatprep.subr.bf16.mxu0 0
      %492 = vmatpush1.bf16.msra.mxu0 %v489
      %493 = vmatprep.subr.bf16.mxu0 0
      %494 = vmatpush1.bf16.msra.mxu0 %v490
      %495 = vmatprep.subr.bf16.mxu0 0
      %496 = vmatpush1.bf16.msra.mxu0 0
      %497 = vmatprep.subr.bf16.mxu0 0
      %498 = vmatpush1.bf16.msra.mxu0 0
      %499 = vmatprep.subr.bf16.mxu0 0
      %500 = vmatpush1.bf16.msra.mxu0 0
      %501 = vmatprep.subr.bf16.mxu0 0
      %502 = vmatpush1.bf16.msra.mxu0 0
      %503 = vmatprep.subr.bf16.mxu0 0
      %504 = vmatpush1.bf16.msra.mxu0 0
      %505 = vmatprep.subr.bf16.mxu0 0
      %506 = vmatpush1.bf16.msra.mxu0 0
      %507 = vmatprep.subr.bf16.mxu0 0
      %508 = vmatpush1.bf16.msra.mxu0 0
      %509 = vmatprep.subr.bf16.mxu0 0
      %510 = vmatpush1.bf16.msra.mxu0 0
      %511 = vmatprep.subr.bf16.mxu0 0
      %512 = vmatpush1.bf16.msra.mxu0 0
      %513 = vmatprep.subr.bf16.mxu0 0
      %514 = vmatpush1.bf16.msra.mxu0 0
      %515 = vmatprep.subr.bf16.mxu0 0
      %516 = vmatpush1.bf16.msra.mxu0 0
      %517 = vmatprep.subr.bf16.mxu0 0
      %518 = vmatpush1.bf16.msra.mxu0 0
      %519 = vmatprep.subr.bf16.mxu0 0
      %520 = vmatpush1.bf16.msra.mxu0 0
      %521 = vmatprep.subr.bf16.mxu0 0
      %522 = vmatpush1.bf16.msra.mxu0 0
      %523 = vmatprep.mubr.bf16.mxu0 0
      %524 = vmatmul.mubr.bf16.gmra.mrb[0].mxu0 %v226
      %v525 = vpop.f32.mrb[0].mxu0
      %v526 = vadd.f32 %v92, %v525
      %v527 = vpop.f32.mrb[0].mxu0
      %v528 = vpop.f32.mrb[0].mxu0
      %v529 = vadd.f32 %v97, %v528
      %v530 = vpop.f32.mrb[0].mxu0
      %531 = vmatprep.mubr.bf16.mxu0 0
      %532 = vmatmul.mubr.bf16.gmra.mrb[0].mxu0 %v229
      %v533 = vpop.f32.mrb[0].mxu0
      %v534 = vadd.f32 %v102, %v533
      %v535 = vpop.f32.mrb[0].mxu0
      %v536 = vpop.f32.mrb[0].mxu0
      %v537 = vadd.f32 %v107, %v536
      %v538 = vpop.f32.mrb[0].mxu0
      %539 = vdwg.mxu0
      %v540 = vtanh.pop %v526
      %v541 = vtanh.pop %v529
      %v542 = vtanh.pop %v534
      %v543 = vtanh.pop %v537
      %v544 = vmul.f32 %v116, %v540
      %v545 = vmul.f32 %v121, %v541
      %v546 = vmul.f32 %v126, %v542
      %v547 = vmul.f32 %v131, %v543
      %v548 = vadd.f32 %v544, %v545
      %v549 = vadd.f32 %v548, %v546
      %v550 = vadd.f32 %v549, %v547
      %v551 = vrot.slane %v550, 4
      %v552 = vadd.f32 %v550, %v551
      %v553 = vrot.slane %v552, 2
      %v554 = vadd.f32 %v552, %v553
      %v555 = vrot.slane %v554, 1
      %v556 = vadd.f32 %v554, %v555
      %v557 = vadd.f32 %v556, %v297
      %v558 = vand.u32 2147483647, %v422
      %vm559 = vcmp.le.f32.partialorder %v558, 0.7853982
      %vm560 = vcmp.lt.s32.totalorder %v422, 0
      %v561 = vand.u32 %v422, 2139095040
      %v562 = vshrl.u32 %v561, 23
      %v563 = vsub.s32 %v562, 127
      %v564 = vand.u32 2147483647, %v422
      %v565 = vand.u32 %v564, 8388607
      %v566 = vor.u32 %v565, 8388608
      %v567 = vsub.s32 0, %v566
      %v568 = vadd.s32 %v563, 1
      %vm569 = vcmp.gt.s32.totalorder %v568, 0
      %v570 = vsel %vm569, %v568, 0
      %v571 = vshrl.u32 %v570, 5
      %v572 = vand.u32 %v570, 31
      %v573 = vsub.s32 32, %v572
      %v574 = vshrl.u32 683565275, %v573
      %v575 = vshll.u32 683565275, %v572
      %v576 = vshrl.u32 2475754826, %v573
      %v577 = vor.u32 %v575, %v576
      %v578 = vshll.u32 2475754826, %v572
      %v579 = vshrl.u32 2131351028, %v573
      %v580 = vor.u32 %v578, %v579
      %v581 = vshll.u32 2131351028, %v572
      %v582 = vshrl.u32 2102212464, %v573
      %v583 = vor.u32 %v581, %v582
      %v584 = vshll.u32 2102212464, %v572
      %v585 = vshrl.u32 920167782, %v573
      %v586 = vor.u32 %v584, %v585
      %v587 = vshll.u32 920167782, %v572
      %v588 = vshrl.u32 1326507024, %v573
      %v589 = vor.u32 %v587, %v588
      %vm590 = vcmp.lt.s32.totalorder %v571, 1
      %vm591 = vcmp.lt.s32.totalorder %v571, 2
      %vm592 = vcmp.lt.s32.totalorder %v571, 3
      %vm593 = vcmp.lt.s32.totalorder %v571, 4
      %v594 = vsel %vm590, %v574, %v577
      %v595 = vsel %vm593, %v583, 2102212464
      %v596 = vsel %vm592, %v580, %v595
      %v597 = vsel %vm591, %v594, %v596
      %v598 = vsel %vm590, %v577, %v580
      %v599 = vsel %vm593, %v586, 920167782
      %v600 = vsel %vm592, %v583, %v599
      %v601 = vsel %vm591, %v598, %v600
      %v602 = vsel %vm590, %v580, %v583
      %v603 = vsel %vm593, %v589, 1326507024
      %v604 = vsel %vm592, %v586, %v603
      %v605 = vsel %vm591, %v602, %v604
      %v606 = vshll.u32 %v566, 8
      %v607 = vmul.u32.u64.compose %v606, %v605
      %v608 = vextract.low.u32 %v607
      %v609 = vextract.high.u32 %v607
      %v610 = vmul.u32.u64.compose %v606, %v601
      %v611 = vextract.low.u32 %v610
      %v612 = vextract.high.u32 %v610
      %v613 = vmul.u32 %v606, %v597
      %v614 = vadd.s32 %v609, %v611
      %vm615 = vc.u32 %v609, %v611
      %v616 = vadd.s32 %v612, 1
      %v617 = vsel %vm615, %v616, %v612
      %v618 = vadd.s32 %v613, %v617
      %v619 = vadd.s32 %v618, 536870912
      %v620 = vshrl.u32 %v619, 30
      %v621 = vshll.u32 %v620, 30
      %v622 = vsub.s32 %v618, %v621
      %vm623 = vcmp.lt.s32.totalorder %v622, 0
      %v624 = vsub.s32 0, %v622
      %v625 = vsel %vm623, %v624, %v622
      %v626 = vclz %v625
      %v627 = vsub.s32 %v626, 2
      %vm628 = vcmp.gt.s32.totalorder 0, %v627
      %v629 = vsel %vm628, 0, %v627
      %v630 = vsub.s32 32, %v629
      %v631 = vshll.u32 %v622, %v629
      %v632 = vshrl.u32 %v614, %v630
      %v633 = vor.u32 %v631, %v632
      %v634 = vsub.s32 4294967266, %v629
      %v635 = vadd.s32 %v634, 127
      %v636 = vshll.u32 %v635, 23
      %v637 = vor.u32 4788187, %v636
      %v638 = vand.u32 2147483647, %v637
      %v640 = vcvt.s32.f32 %v633
      %v641 = vmul.f32 %v640, %v638
      %v642 = vxor.u32 %v641, 2147483648
      %v643 = vsel %vm560, %v642, %v641
      %v644 = vsub.s32 4, %v620
      %v645 = vsel %vm560, %v644, %v620
      %v646 = vsel %vm559, %v422, %v643
      %v647 = vsel %vm559, 0, %v645
      %v648 = vcosq.f32.pop %v646
      %v649 = vsinq.f32.pop %v646
      %vm650 = vweird.f32 %v422
      %v651 = vadd.s32 %v647, 3
      %v652 = vand.u32 %v651, 3
      %vm653 = vcmp.lt.s32.totalorder %v652, 2
      %vm654 = vcmp.eq.s32.totalorder %v652, 0
      %v655 = vxor.u32 %v649, 2147483648
      %v656 = vsel %vm654, %v648, %v655
      %vm657 = vcmp.eq.s32.totalorder %v652, 2
      %v658 = vxor.u32 %v648, 2147483648
      %v659 = vsel %vm657, %v658, %v649
      %v660 = vsel %vm653, %v656, %v659
      %v661 = vsel %vm650, nan, %v660
      %v663 = vrot.slane %v661, 7
      %v665 = vmul.f32 %v299, %v663
      %v667 = vrot.slane %v422, 7
      %v669 = vmul.f32 %v48, %v667
      %v671 = vrot.slane %v669, 1
      %v673 = vsub.f32 %v665, %v671
      %v674 = vadd.f32 %v673, %v557
      %v675 = vrot.slane %v422, 1
      %v677 = vsel %vm135, %v675, %v674
      %v678 = vstv %s428
      %v679 = vmul.f32 %v678, %v677
      %v680 = vadd.f32 %v422, %v679
      %s681 = scalar_lea.vmem [#allocation6], %s426
      %682 = vst [vmem:[%s681] sm:$0x1] %v680
      %s683 = sld [smem:[#allocation3 + %s426]]
      %s684 = sadd.s32 %s145, 3
      %s685 = sld [smem:[#allocation3 + %s684]]
      %s686 = ssub.f32 %s685, %s683
      %v687 = vstv %s683
      %v688 = vsel %vm154, %v680, %v687
      %v689 = vsel %vm156, %v688, %v152
      %v690 = vpack.c.bf16 %v689, %v689
      %v692 = vsel %vm156, %v690, 0
      %694 = vmatprep.subr.bf16.mxu0 0
      %695 = vmatpush1.bf16.msra.mxu0 %v692
      %696 = vmatprep.subr.bf16.mxu0 0
      %697 = vmatpush1.bf16.msra.mxu0 0
      %698 = vmatprep.subr.bf16.mxu0 0
      %699 = vmatpush1.bf16.msra.mxu0 0
      %700 = vmatprep.subr.bf16.mxu0 0
      %701 = vmatpush1.bf16.msra.mxu0 0
      %702 = vmatprep.subr.bf16.mxu0 0
      %703 = vmatpush1.bf16.msra.mxu0 0
      %704 = vmatprep.subr.bf16.mxu0 0
      %705 = vmatpush1.bf16.msra.mxu0 0
      %706 = vmatprep.subr.bf16.mxu0 0
      %707 = vmatpush1.bf16.msra.mxu0 0
      %708 = vmatprep.subr.bf16.mxu0 0
      %709 = vmatpush1.bf16.msra.mxu0 0
      %710 = vmatprep.subr.bf16.mxu0 0
      %711 = vmatpush1.bf16.msra.mxu0 0
      %712 = vmatprep.subr.bf16.mxu0 0
      %713 = vmatpush1.bf16.msra.mxu0 0
      %714 = vmatprep.subr.bf16.mxu0 0
      %715 = vmatpush1.bf16.msra.mxu0 0
      %716 = vmatprep.subr.bf16.mxu0 0
      %717 = vmatpush1.bf16.msra.mxu0 0
      %718 = vmatprep.subr.bf16.mxu0 0
      %719 = vmatpush1.bf16.msra.mxu0 0
      %720 = vmatprep.subr.bf16.mxu0 0
      %721 = vmatpush1.bf16.msra.mxu0 0
      %722 = vmatprep.subr.bf16.mxu0 0
      %723 = vmatpush1.bf16.msra.mxu0 0
      %724 = vmatprep.subr.bf16.mxu0 0
      %725 = vmatpush1.bf16.msra.mxu0 0
      %726 = vmatprep.mubr.bf16.mxu0 0
      %727 = vmatmul.mubr.bf16.gmra.mrb[0].mxu0 %v161
      %v728 = vpop.f32.mrb[0].mxu0
      %v729 = vadd.f32 %v68, %v728
      %v730 = vpop.f32.mrb[0].mxu0
      %v731 = vpop.f32.mrb[0].mxu0
      %v732 = vadd.f32 %v73, %v731
      %v733 = vpop.f32.mrb[0].mxu0
      %734 = vmatprep.mubr.bf16.mxu0 0
      %735 = vmatmul.mubr.bf16.gmra.mrb[0].mxu0 %v164
      %v736 = vpop.f32.mrb[0].mxu0
      %v737 = vadd.f32 %v78, %v736
      %v738 = vpop.f32.mrb[0].mxu0
      %v739 = vpop.f32.mrb[0].mxu0
      %v740 = vadd.f32 %v83, %v739
      %v741 = vpop.f32.mrb[0].mxu0
      %742 = vdwg.mxu0
      %v743 = vtanh.pop %v729
      %v744 = vtanh.pop %v732
      %v745 = vtanh.pop %v737
      %v746 = vtanh.pop %v740
      %v747 = vpack.c.bf16 %v744, %v743
      %v748 = vpack.c.bf16 %v746, %v745
      %749 = vmatprep.subr.bf16.mxu0 0
      %750 = vmatpush1.bf16.msra.mxu0 %v747
      %751 = vmatprep.subr.bf16.mxu0 0
      %752 = vmatpush1.bf16.msra.mxu0 %v748
      %753 = vmatprep.subr.bf16.mxu0 0
      %754 = vmatpush1.bf16.msra.mxu0 0
      %755 = vmatprep.subr.bf16.mxu0 0
      %756 = vmatpush1.bf16.msra.mxu0 0
      %757 = vmatprep.subr.bf16.mxu0 0
      %758 = vmatpush1.bf16.msra.mxu0 0
      %759 = vmatprep.subr.bf16.mxu0 0
      %760 = vmatpush1.bf16.msra.mxu0 0
      %761 = vmatprep.subr.bf16.mxu0 0
      %762 = vmatpush1.bf16.msra.mxu0 0
      %763 = vmatprep.subr.bf16.mxu0 0
      %764 = vmatpush1.bf16.msra.mxu0 0
      %765 = vmatprep.subr.bf16.mxu0 0
      %766 = vmatpush1.bf16.msra.mxu0 0
      %767 = vmatprep.subr.bf16.mxu0 0
      %768 = vmatpush1.bf16.msra.mxu0 0
      %769 = vmatprep.subr.bf16.mxu0 0
      %770 = vmatpush1.bf16.msra.mxu0 0
      %771 = vmatprep.subr.bf16.mxu0 0
      %772 = vmatpush1.bf16.msra.mxu0 0
      %773 = vmatprep.subr.bf16.mxu0 0
      %774 = vmatpush1.bf16.msra.mxu0 0
      %775 = vmatprep.subr.bf16.mxu0 0
      %776 = vmatpush1.bf16.msra.mxu0 0
      %777 = vmatprep.subr.bf16.mxu0 0
      %778 = vmatpush1.bf16.msra.mxu0 0
      %779 = vmatprep.subr.bf16.mxu0 0
      %780 = vmatpush1.bf16.msra.mxu0 0
      %781 = vmatprep.mubr.bf16.mxu0 0
      %782 = vmatmul.mubr.bf16.gmra.mrb[0].mxu0 %v226
      %v783 = vpop.f32.mrb[0].mxu0
      %v784 = vadd.f32 %v92, %v783
      %v785 = vpop.f32.mrb[0].mxu0
      %v786 = vpop.f32.mrb[0].mxu0
      %v787 = vadd.f32 %v97, %v786
      %v788 = vpop.f32.mrb[0].mxu0
      %789 = vmatprep.mubr.bf16.mxu0 0
      %790 = vmatmul.mubr.bf16.gmra.mrb[0].mxu0 %v229
      %v791 = vpop.f32.mrb[0].mxu0
      %v792 = vadd.f32 %v102, %v791
      %v793 = vpop.f32.mrb[0].mxu0
      %v794 = vpop.f32.mrb[0].mxu0
      %v795 = vadd.f32 %v107, %v794
      %v796 = vpop.f32.mrb[0].mxu0
      %797 = vdwg.mxu0
      %v798 = vtanh.pop %v784
      %v799 = vtanh.pop %v787
      %v800 = vtanh.pop %v792
      %v801 = vtanh.pop %v795
      %v802 = vmul.f32 %v116, %v798
      %v803 = vmul.f32 %v121, %v799
      %v804 = vmul.f32 %v126, %v800
      %v805 = vmul.f32 %v131, %v801
      %v806 = vadd.f32 %v802, %v803
      %v807 = vadd.f32 %v806, %v804
      %v808 = vadd.f32 %v807, %v805
      %v809 = vrot.slane %v808, 4
      %v810 = vadd.f32 %v808, %v809
      %v811 = vrot.slane %v810, 2
      %v812 = vadd.f32 %v810, %v811
      %v813 = vrot.slane %v812, 1
      %v814 = vadd.f32 %v812, %v813
      %v815 = vadd.f32 %v814, %v297
      %v816 = vand.u32 2147483647, %v680
      %vm817 = vcmp.le.f32.partialorder %v816, 0.7853982
      %vm818 = vcmp.lt.s32.totalorder %v680, 0
      %v819 = vand.u32 %v680, 2139095040
      %v820 = vshrl.u32 %v819, 23
      %v821 = vsub.s32 %v820, 127
      %v822 = vand.u32 2147483647, %v680
      %v823 = vand.u32 %v822, 8388607
      %v824 = vor.u32 %v823, 8388608
      %v825 = vsub.s32 0, %v824
      %v826 = vadd.s32 %v821, 1
      %vm827 = vcmp.gt.s32.totalorder %v826, 0
      %v828 = vsel %vm827, %v826, 0
      %v829 = vshrl.u32 %v828, 5
      %v830 = vand.u32 %v828, 31
      %v831 = vsub.s32 32, %v830
      %v832 = vshrl.u32 683565275, %v831
      %v833 = vshll.u32 683565275, %v830
      %v834 = vshrl.u32 2475754826, %v831
      %v835 = vor.u32 %v833, %v834
      %v836 = vshll.u32 2475754826, %v830
      %v837 = vshrl.u32 2131351028, %v831
      %v838 = vor.u32 %v836, %v837
      %v839 = vshll.u32 2131351028, %v830
      %v840 = vshrl.u32 2102212464, %v831
      %v841 = vor.u32 %v839, %v840
      %v842 = vshll.u32 2102212464, %v830
      %v843 = vshrl.u32 920167782, %v831
      %v844 = vor.u32 %v842, %v843
      %v845 = vshll.u32 920167782, %v830
      %v846 = vshrl.u32 1326507024, %v831
      %v847 = vor.u32 %v845, %v846
      %vm848 = vcmp.lt.s32.totalorder %v829, 1
      %vm849 = vcmp.lt.s32.totalorder %v829, 2
      %vm850 = vcmp.lt.s32.totalorder %v829, 3
      %vm851 = vcmp.lt.s32.totalorder %v829, 4
      %v852 = vsel %vm848, %v832, %v835
      %v853 = vsel %vm851, %v841, 2102212464
      %v854 = vsel %vm850, %v838, %v853
      %v855 = vsel %vm849, %v852, %v854
      %v856 = vsel %vm848, %v835, %v838
      %v857 = vsel %vm851, %v844, 920167782
      %v858 = vsel %vm850, %v841, %v857
      %v859 = vsel %vm849, %v856, %v858
      %v860 = vsel %vm848, %v838, %v841
      %v861 = vsel %vm851, %v847, 1326507024
      %v862 = vsel %vm850, %v844, %v861
      %v863 = vsel %vm849, %v860, %v862
      %v864 = vshll.u32 %v824, 8
      %v865 = vmul.u32.u64.compose %v864, %v863
      %v866 = vextract.low.u32 %v865
      %v867 = vextract.high.u32 %v865
      %v868 = vmul.u32.u64.compose %v864, %v859
      %v869 = vextract.low.u32 %v868
      %v870 = vextract.high.u32 %v868
      %v871 = vmul.u32 %v864, %v855
      %v872 = vadd.s32 %v867, %v869
      %vm873 = vc.u32 %v867, %v869
      %v874 = vadd.s32 %v870, 1
      %v875 = vsel %vm873, %v874, %v870
      %v876 = vadd.s32 %v871, %v875
      %v877 = vadd.s32 %v876, 536870912
      %v878 = vshrl.u32 %v877, 30
      %v879 = vshll.u32 %v878, 30
      %v880 = vsub.s32 %v876, %v879
      %vm881 = vcmp.lt.s32.totalorder %v880, 0
      %v882 = vsub.s32 0, %v880
      %v883 = vsel %vm881, %v882, %v880
      %v884 = vclz %v883
      %v885 = vsub.s32 %v884, 2
      %vm886 = vcmp.gt.s32.totalorder 0, %v885
      %v887 = vsel %vm886, 0, %v885
      %v888 = vsub.s32 32, %v887
      %v889 = vshll.u32 %v880, %v887
      %v890 = vshrl.u32 %v872, %v888
      %v891 = vor.u32 %v889, %v890
      %v892 = vsub.s32 4294967266, %v887
      %v893 = vadd.s32 %v892, 127
      %v894 = vshll.u32 %v893, 23
      %v895 = vor.u32 4788187, %v894
      %v896 = vand.u32 2147483647, %v895
      %v898 = vcvt.s32.f32 %v891
      %v899 = vmul.f32 %v898, %v896
      %v900 = vxor.u32 %v899, 2147483648
      %v901 = vsel %vm818, %v900, %v899
      %v902 = vsub.s32 4, %v878
      %v903 = vsel %vm818, %v902, %v878
      %v904 = vsel %vm817, %v680, %v901
      %v905 = vsel %vm817, 0, %v903
      %v906 = vcosq.f32.pop %v904
      %v907 = vsinq.f32.pop %v904
      %vm908 = vweird.f32 %v680
      %v909 = vadd.s32 %v905, 3
      %v910 = vand.u32 %v909, 3
      %vm911 = vcmp.lt.s32.totalorder %v910, 2
      %vm912 = vcmp.eq.s32.totalorder %v910, 0
      %v913 = vxor.u32 %v907, 2147483648
      %v914 = vsel %vm912, %v906, %v913
      %vm915 = vcmp.eq.s32.totalorder %v910, 2
      %v916 = vxor.u32 %v906, 2147483648
      %v917 = vsel %vm915, %v916, %v907
      %v918 = vsel %vm911, %v914, %v917
      %v919 = vsel %vm908, nan, %v918
      %v921 = vrot.slane %v919, 7
      %v923 = vmul.f32 %v299, %v921
      %v925 = vrot.slane %v680, 7
      %v927 = vmul.f32 %v48, %v925
      %v929 = vrot.slane %v927, 1
      %v931 = vsub.f32 %v923, %v929
      %v932 = vadd.f32 %v931, %v815
      %v933 = vrot.slane %v680, 1
      %v935 = vsel %vm135, %v933, %v932
      %v936 = vstv %s686
      %v937 = vmul.f32 %v936, %v935
      %v938 = vadd.f32 %v680, %v937
      %s939 = scalar_lea.vmem [#allocation6], %s684
      %940 = vst [vmem:[%s939] sm:$0x1] %v938
    $region46: #{tpu_custom_call.1} parent=1 // loop_footer
      %s143 = sadd.s32 1, %s139
    $region47: #{tpu_custom_call.1} parent=1 // loop_footer_branch
      %138 = sbr.rel target = $region43
    $region48: #{tpu_custom_call.1} parent=1 // loop_exit
      _
    // Predicated region
    $region49: #{tpu_custom_call.1} parent=1 // pred_check
      _
    $region50: #{tpu_custom_call.1} parent=1 // pred_check_branch
      %942 = sbr.rel (0) target = $region52
    $region51: #{tpu_custom_call.1} parent=1 // pred_region
      %s944 = ssub.s32 256, 256
      %945 = vsyncadd [#allocation4], %s944
      %s946 = sshll.u32 [#allocation6], 4
      %s947 = int_to_ptr.vmem [resolvable:$true] %s946
      %952 = dma.vmem_to_hbm [thread:$0]  %s947, 256, %s9, [#allocation4], 128, 128, 8
    $region52: #{tpu_custom_call.1} parent=1 // pred_fallthru
      _
    // Predicated region
    $region53: #{tpu_custom_call.1} parent=1 // pred_check
      _
    $region54: #{tpu_custom_call.1} parent=1 // pred_check_branch
      %954 = sbr.rel (0) target = $region56
    $region55: #{tpu_custom_call.1} parent=1 // pred_region
      %955 = dma.done [#allocation4], 256
    $region56: #{tpu_custom_call.1} parent=1 // pred_fallthru
      _
    %956 = vsyncpa [#allocation4], 1
    %957 = vsyncpa [#allocation5], 1

</llo_original>
